<compile_context>
chip_gen: v5e
topology: v5e:2x2
jax: 0.10.0
libtpu: 0.0.40
codegen_flags: <defaults>
</compile_context>

<pallas_src>
import math
import functools
import numpy as np
import jax
import jax.numpy as jnp
from jax.experimental import pallas as pl
from jax.experimental.pallas import tpu as pltpu


# --------------------------------------------------------------------------- #
# Pallas kernel: one batch element per grid step, lanes = N (nodes)
# --------------------------------------------------------------------------- #
def timeblock_kernel(eca_ref, x_ref, wconv_ref, shift_ref, wlin_ref, blin_ref, o_ref,
                     *, n_nodes, t_in, c_out):
    # eca_ref  : SMEM [3]               ECA k=3 channel-conv taps (scalar prefetch)
    # x_ref    : [1, Tp*Cin, N]         zero-padded input slab, row = tp*Cin + cin   (streamed)
    # wconv_ref: [T*Cout, Tp*Cin]       banded temporal-conv weight, BN scale folded (resident)
    # shift_ref: [T*Cout, 1]   f32      BN shift with conv bias folded               (resident)
    # wlin_ref : [T_out*Cout, T*Cout]   kron(W_lin, I_Cout)                          (resident)
    # blin_ref : [T_out*Cout, 1] f32    Linear bias per (s, c) row                   (resident)
    # o_ref    : [1, T_out*Cout, N]
    x = x_ref[0]                                                       # [Tp*Cin, N]

    # ---- 3 conv branches (k=3/5/1) + bias + BN + ReLU: ONE resident-weight MXU matmul ----
    acc = jnp.dot(wconv_ref[...], x, preferred_element_type=jnp.float32)   # [T*Cout, N] f32
    y = jnp.maximum(acc + shift_ref[...], 0.0)

    # ---- ECA gate: per-channel mean over (n, t) ----
    col = jnp.sum(y, axis=1, keepdims=True)                            # [T*Cout, 1] (XLU lane reduce)
    m = col[0:c_out]
    for t in range(1, t_in):                                           # (T-1) single-vreg VPU adds
        m = m + col[t * c_out:(t + 1) * c_out]
    m = m * (1.0 / (n_nodes * t_in))                                   # [Cout, 1] channel mean

    # k=3 channel conv (zero padded) via XLU sublane roll + VPU FMA + EUP sigmoid
    c_idx = jax.lax.broadcasted_iota(jnp.int32, (c_out, 1), 0)
    m_up = jnp.where(c_idx >= 1, pltpu.roll(m, 1, 0), 0.0)             # m[c-1]
    m_dn = jnp.where(c_idx <= c_out - 2, pltpu.roll(m, c_out - 1, 0), 0.0)  # m[c+1]
    gate = jax.nn.sigmoid(eca_ref[0] * m_up + eca_ref[1] * m + eca_ref[2] * m_dn)  # [Cout, 1]

    # broadcast gate over the t part of the (t, c) row index; second ReLU of the
    # reference is a no-op (y >= 0, gate > 0) -> dropped
    gate_col = jnp.concatenate([gate] * t_in, axis=0)                  # [T*Cout, 1]
    yg = y * gate_col

    # ---- Linear(T -> T_out): ONE resident kron(W_lin, I_Cout) MXU matmul, lanes stay = N ----
    out = jnp.dot(wlin_ref[...], yg.astype(wlin_ref.dtype),
                  preferred_element_type=jnp.float32) + blin_ref[...]  # [T_out*Cout, N]
    o_ref[0] = out.astype(o_ref.dtype)


# --------------------------------------------------------------------------- #
# Wrapper: single-pass layout prep (no im2col duplication) + pallas_call + un-layout
# --------------------------------------------------------------------------- #
def timeblock_forward(x, folded, use_bf16=True):
    """x: [B, N, T, Cin] -> [B, N, T - t_re, Cout]"""
    wconv, shift_col, wlin_big, blin_col, eca_w = folded
    B, N, T, Cin = x.shape
    TCout, TpCin = wconv.shape
    Cout = TCout // T
    Tp = TpCin // Cin
    SCout = wlin_big.shape[0]
    T_out = SCout // Cout
    pad = (Tp - T) // 2

    # layout prep (one pass, no 5x duplication): [B, N, T, Cin] -> [B, Tp*Cin, N]
    x_p = jnp.pad(x, ((0, 0), (0, 0), (pad, pad), (0, 0)))
    x_slab = jnp.transpose(x_p, (0, 2, 3, 1)).reshape(B, Tp * Cin, N)

    cdt = jnp.bfloat16 if use_bf16 else jnp.float32                    # bf16 MXU path on v6e/v7x
    kernel = functools.partial(timeblock_kernel, n_nodes=N, t_in=T, c_out=Cout)

    out_slab = pl.pallas_call(
        kernel,
        out_shape=jax.ShapeDtypeStruct((B, SCout, N), jnp.float32),
        grid_spec=pltpu.PrefetchScalarGridSpec(
            num_scalar_prefetch=1,                                     # ECA taps -> SMEM
            grid=(B,),
            in_specs=[
                pl.BlockSpec((1, Tp * Cin, N), lambda b, e: (b, 0, 0)),   # streamed per step
                pl.BlockSpec((TCout, TpCin), lambda b, e: (0, 0)),        # resident weight
                pl.BlockSpec((TCout, 1), lambda b, e: (0, 0)),            # resident shift
                pl.BlockSpec((SCout, TCout), lambda b, e: (0, 0)),        # resident weight
                pl.BlockSpec((SCout, 1), lambda b, e: (0, 0)),            # resident bias
            ],
            out_specs=pl.BlockSpec((1, SCout, N), lambda b, e: (b, 0, 0)),
        ),
        compiler_params=pltpu.CompilerParams(dimension_semantics=("parallel",)),
    )(eca_w, x_slab.astype(cdt), wconv.astype(cdt), shift_col,
      wlin_big.astype(cdt), blin_col)

    # [B, (s, c), N] -> [B, N, T_out, Cout]
    return out_slab.reshape(B, T_out, Cout, N).transpose(0, 3, 1, 2)


# --------------------------------------------------------------------------- #
# Deterministic parameter init (same shapes as the PyTorch module)
# --------------------------------------------------------------------------- #
def init_params(key, in_c, out_c, T, t_re):
    c4, c2 = out_c // 4, out_c // 2
    ks = jax.random.split(key, 9)

    def conv_params(k, co, kw):
        kw_, kb_ = jax.random.split(k)
        bound = 1.0 / math.sqrt(in_c * kw)
        w = jax.random.uniform(kw_, (co, in_c, 1, kw), jnp.float32, -bound, bound)
        b = jax.random.uniform(kb_, (co,), jnp.float32, -bound, bound)
        return w, b

    def bn_params(k, co):
        k1, k2, k3, k4 = jax.random.split(k, 4)
        g = 1.0 + 0.1 * jax.random.normal(k1, (co,), jnp.float32)
        bt = 0.1 * jax.random.normal(k2, (co,), jnp.float32)
        rm = 0.1 * jax.random.normal(k3, (co,), jnp.float32)
        rv = 0.5 + jax.random.uniform(k4, (co,), jnp.float32)
        return g, bt, rm, rv

    w2, b2 = conv_params(ks[0], c2, 3)
    w3, b3 = conv_params(ks[2], c4, 5)
    w4, b4 = conv_params(ks[4], c4, 1)
    weca = jax.random.uniform(ks[6], (3,), jnp.float32, -1.0, 1.0)
    bound = 1.0 / math.sqrt(T)
    wlin = jax.random.uniform(ks[7], (T - t_re, T), jnp.float32, -bound, bound)
    blin = jax.random.uniform(ks[8], (T - t_re,), jnp.float32, -bound, bound)
    return dict(line2=(w2, b2) + bn_params(ks[1], c2),
                line3=(w3, b3) + bn_params(ks[3], c4),
                line4=(w4, b4) + bn_params(ks[5], c4),
                eca_w=weca, lin_w=wlin, lin_b=blin)


# --------------------------------------------------------------------------- #
# Folding: conv branches + BN scale -> banded [T*Cout, Tp*Cin]; Linear -> kron(W, I_Cout)
# --------------------------------------------------------------------------- #
def fold_params(p, in_c, out_c):
    eps = 1e-3
    c4, c2 = out_c // 4, out_c // 2
    K = 5
    T_out, T = p['lin_w'].shape
    Tp = T + K - 1

    # merge the 3 temporal-conv branches into one width-5 kernel W [Cout, Cin, K]
    W = jnp.zeros((out_c, in_c, K), jnp.float32)
    W = W.at[0:c2, :, 1:4].set(p['line2'][0][:, :, 0, :])          # k=3, pad=1 -> taps 1..3
    W = W.at[c2:c2 + c4, :, :].set(p['line3'][0][:, :, 0, :])      # k=5, pad=2 -> taps 0..4
    W = W.at[c2 + c4:, :, 2:3].set(p['line4'][0][:, :, 0, :])      # k=1, pad=0 -> tap 2

    b = jnp.concatenate([p['line2'][1], p['line3'][1], p['line4'][1]])
    g = jnp.concatenate([p['line2'][2], p['line3'][2], p['line4'][2]])
    bt = jnp.concatenate([p['line2'][3], p['line3'][3], p['line4'][3]])
    rm = jnp.concatenate([p['line2'][4], p['line3'][4], p['line4'][4]])
    rv = jnp.concatenate([p['line2'][5], p['line3'][5], p['line4'][5]])

    scale = g / jnp.sqrt(rv + eps)                                  # [Cout]
    shift = bt - rm * scale + b * scale                             # conv bias folded in

    # BN scale folded into the conv weight (removes per-slab VPU multiply + one input)
    Ws = W * scale[:, None, None]                                   # [Cout, Cin, K]

    # unroll the temporal conv over t into a banded matrix:
    #   wconv[(t, c), (tp, cin)] = Ws[c, cin, tp - t]   for 0 <= tp - t < K   (x is T-padded by 2)
    Wk = jnp.transpose(Ws, (0, 2, 1))                               # [Cout, K, Cin]
    rows = []
    for t in range(T):
        blk = jnp.zeros((out_c, Tp, in_c), jnp.float32).at[:, t:t + K, :].set(Wk)
        rows.append(blk.reshape(out_c, Tp * in_c))
    wconv = jnp.concatenate(rows, axis=0)                           # [T*Cout, Tp*Cin]

    shift_col = jnp.tile(shift, T)[:, None]                         # [T*Cout, 1]  row (t,c) -> shift[c]

    # Linear(T -> T_out) lifted onto the (t, c) row layout: kron(W_lin, I_Cout)
    # (Cout-fold "redundancy" fills otherwise-padded MXU M/K dims; independent of B and N.)
    wlin_big = jnp.kron(p['lin_w'], jnp.eye(out_c, dtype=jnp.float32))   # [T_out*Cout, T*Cout]
    blin_col = jnp.repeat(p['lin_b'], out_c)[:, None]                    # [T_out*Cout, 1] row (s,c)->b[s]

    return wconv, shift_col, wlin_big, blin_col, p['eca_w']


# --------------------------------------------------------------------------- #
# Pure-JAX reference (mirrors the PyTorch forward directly, from raw params)
# --------------------------------------------------------------------------- #
def ref_forward(x, p):
    eps = 1e-3
    x0 = jnp.transpose(x, (0, 3, 1, 2))                             # [B, Cin, N, T]

    def basic(inp, w, b, g, bt, rm, rv):
        k = w.shape[-1]
        pad = (k - 1) // 2
        T_ = inp.shape[-1]
        xp = jnp.pad(inp, ((0, 0), (0, 0), (0, 0), (pad, pad)))
        out = jnp.zeros((inp.shape[0], w.shape[0], inp.shape[2], T_), jnp.float32)
        for kk in range(k):
            out = out + jnp.einsum('bcnt,oc->bont', xp[..., kk:kk + T_], w[:, :, 0, kk])
        out = out + b[None, :, None, None]
        out = ((out - rm[None, :, None, None]) * (g / jnp.sqrt(rv + eps))[None, :, None, None]
               + bt[None, :, None, None])
        return jax.nn.relu(out)

    x2 = basic(x0, *p['line2'])
    x3 = basic(x0, *p['line3'])
    x4 = basic(x0, *p['line4'])
    cat = jnp.concatenate([x2, x3, x4], axis=1)                     # [B, C, N, T]

    m = jnp.mean(cat, axis=(2, 3))                                  # [B, C]
    C = m.shape[1]
    mp = jnp.pad(m, ((0, 0), (1, 1)))
    we = p['eca_w']
    z = we[0] * mp[:, 0:C] + we[1] * mp[:, 1:C + 1] + we[2] * mp[:, 2:C + 2]
    s = jax.nn.sigmoid(z)
    out = jax.nn.relu(cat * s[:, :, None, None])

    out = jnp.einsum('bcnt,st->bcns', out, p['lin_w']) + p['lin_b'][None, None, None, :]
    return jnp.transpose(out, (0, 2, 3, 1))                         # [B, N, T_out, C]


# --------------------------------------------------------------------------- #
if __name__ == "__main__":
    B, N, T, in_c, out_c, t_re = 2, 128, 8, 4, 8, 2                 # N=128 -> lane-dense slabs
    key = jax.random.PRNGKey(0)
    kx, kp = jax.random.split(key)

    x = jax.random.normal(kx, (B, N, T, in_c), jnp.float32)
    raw = init_params(kp, in_c, out_c, T, t_re)
    folded = fold_params(raw, in_c, out_c)
    ref = jax.block_until_ready(ref_forward(x, raw))

    # f32 operand path: tight check
    out_f32 = jax.block_until_ready(timeblock_forward(x, folded, use_bf16=False))
    assert out_f32.shape == (B, N, T - t_re, out_c)
    np.testing.assert_allclose(np.asarray(out_f32), np.asarray(ref), rtol=1e-4, atol=1e-4)

    # bf16 operand path (v6e/v7x MXU fast path, f32 accumulation): relaxed tolerance
    out_bf16 = jax.block_until_ready(timeblock_forward(x, folded, use_bf16=True))
    assert out_bf16.shape == (B, N, T - t_re, out_c)
    np.testing.assert_allclose(np.asarray(out_bf16), np.asarray(ref), rtol=5e-2, atol=5e-2)

    # generality: N not a multiple of 128 (masked lane tail, same folded weights)
    x_s = jax.random.normal(jax.random.PRNGKey(1), (B, 16, T, in_c), jnp.float32)
    out_s = jax.block_until_ready(timeblock_forward(x_s, folded, use_bf16=False))
    np.testing.assert_allclose(np.asarray(out_s), np.asarray(ref_forward(x_s, raw)),
                               rtol=1e-4, atol=1e-4)

    print("KERNEL_OK")
</pallas_src>

<mosaic_0001>
module attributes {stable_mosaic.version = 11 : i64} {
  func.func @timeblock_kernel(%arg0: i32, %arg1: memref<3xf32, #tpu.memory_space<smem>>, %arg2: memref<1x48x128xf32, #tpu.memory_space<vmem>>, %arg3: memref<64x48xf32, #tpu.memory_space<vmem>>, %arg4: memref<64x1xf32, #tpu.memory_space<vmem>>, %arg5: memref<48x64xf32, #tpu.memory_space<vmem>>, %arg6: memref<48x1xf32, #tpu.memory_space<vmem>>, %arg7: memref<1x48x128xf32, #tpu.memory_space<vmem>>) attributes {dimension_semantics = [#tpu.dimension_semantics<parallel>], iteration_bounds = array<i64: 2>, scalar_prefetch = 1 : i64, scratch_operands = 0 : i64, tpu.core_type = #tpu.core_type<tc>, window_params = [{transform_indices = @transform_0, window_bounds = array<i64: 1, 48, 128>}, {pipeline_mode = #tpu.pipeline_mode<synchronous>, transform_indices = @transform_1, window_bounds = array<i64: 64, 48>}, {pipeline_mode = #tpu.pipeline_mode<synchronous>, transform_indices = @transform_2, window_bounds = array<i64: 64, 1>}, {pipeline_mode = #tpu.pipeline_mode<synchronous>, transform_indices = @transform_3, window_bounds = array<i64: 48, 64>}, {pipeline_mode = #tpu.pipeline_mode<synchronous>, transform_indices = @transform_4, window_bounds = array<i64: 48, 1>}, {transform_indices = @transform_5, window_bounds = array<i64: 1, 48, 128>}]} {
    %c0 = arith.constant 0 : index
    %c0_0 = arith.constant 0 : index
    %c0_1 = arith.constant 0 : index
    %0 = vector.load %arg2[%c0, %c0_0, %c0_1] : memref<1x48x128xf32, #tpu.memory_space<vmem>>, vector<1x48x128xf32>
    %1 = vector.shape_cast %0 : vector<1x48x128xf32> to vector<48x128xf32>
    %c0_2 = arith.constant 0 : index
    %c0_3 = arith.constant 0 : index
    %2 = vector.load %arg3[%c0_2, %c0_3] : memref<64x48xf32, #tpu.memory_space<vmem>>, vector<64x48xf32>
    %cst = arith.constant dense<0.000000e+00> : vector<64x128xf32>
    %3 = tpu.matmul %2, %1, %cst {dimension_numbers = #tpu.dot_dimension_numbers<[1], [0], [0], [1], [0, 0, 1, 1], [], []>} : vector<64x48xf32>, vector<48x128xf32>, vector<64x128xf32> -> vector<64x128xf32>
    %c0_4 = arith.constant 0 : index
    %c0_5 = arith.constant 0 : index
    %4 = vector.load %arg4[%c0_4, %c0_5] : memref<64x1xf32, #tpu.memory_space<vmem>>, vector<64x1xf32>
    %5 = vector.broadcast %4 : vector<64x1xf32> to vector<64x128xf32>
    %6 = arith.addf %3, %5 : vector<64x128xf32>
    %cst_6 = arith.constant 0.000000e+00 : f32
    %7 = vector.broadcast %cst_6 : f32 to vector<64x128xf32>
    %8 = arith.maximumf %6, %7 : vector<64x128xf32>
    %cst_7 = arith.constant dense<0.000000e+00> : vector<64xf32>
    %9 = vector.multi_reduction <add>, %8, %cst_7 [1] : vector<64x128xf32> to vector<64xf32>
    %10 = vector.shape_cast %9 : vector<64xf32> to vector<64x1xf32>
    %11 = vector.extract_strided_slice %10 {offsets = [0, 0], sizes = [8, 1], strides = [1, 1]} : vector<64x1xf32> to vector<8x1xf32>
    %12 = vector.extract_strided_slice %10 {offsets = [8, 0], sizes = [8, 1], strides = [1, 1]} : vector<64x1xf32> to vector<8x1xf32>
    %13 = arith.addf %11, %12 : vector<8x1xf32>
    %14 = vector.extract_strided_slice %10 {offsets = [16, 0], sizes = [8, 1], strides = [1, 1]} : vector<64x1xf32> to vector<8x1xf32>
    %15 = arith.addf %13, %14 : vector<8x1xf32>
    %16 = vector.extract_strided_slice %10 {offsets = [24, 0], sizes = [8, 1], strides = [1, 1]} : vector<64x1xf32> to vector<8x1xf32>
    %17 = arith.addf %15, %16 : vector<8x1xf32>
    %18 = vector.extract_strided_slice %10 {offsets = [32, 0], sizes = [8, 1], strides = [1, 1]} : vector<64x1xf32> to vector<8x1xf32>
    %19 = arith.addf %17, %18 : vector<8x1xf32>
    %20 = vector.extract_strided_slice %10 {offsets = [40, 0], sizes = [8, 1], strides = [1, 1]} : vector<64x1xf32> to vector<8x1xf32>
    %21 = arith.addf %19, %20 : vector<8x1xf32>
    %22 = vector.extract_strided_slice %10 {offsets = [48, 0], sizes = [8, 1], strides = [1, 1]} : vector<64x1xf32> to vector<8x1xf32>
    %23 = arith.addf %21, %22 : vector<8x1xf32>
    %24 = vector.extract_strided_slice %10 {offsets = [56, 0], sizes = [8, 1], strides = [1, 1]} : vector<64x1xf32> to vector<8x1xf32>
    %25 = arith.addf %23, %24 : vector<8x1xf32>
    %cst_8 = arith.constant 9.765625E-4 : f32
    %26 = vector.broadcast %cst_8 : f32 to vector<8x1xf32>
    %27 = arith.mulf %25, %26 : vector<8x1xf32>
    %28 = tpu.iota {dimensions = array<i32: 0>} : vector<8x1xi32>
    %c1_i32 = arith.constant 1 : i32
    %29 = vector.broadcast %c1_i32 : i32 to vector<8x1xi32>
    %30 = arith.cmpi sge, %28, %29 : vector<8x1xi32>
    %c1_i32_9 = arith.constant 1 : i32
    %31 = tpu.dynamic_rotate %27 by %c1_i32_9 dim 0 : vector<8x1xf32>, i32 -> vector<8x1xf32>
    %cst_10 = arith.constant 0.000000e+00 : f32
    %32 = vector.broadcast %cst_10 : f32 to vector<8x1xf32>
    %33 = arith.select %30, %31, %32 : vector<8x1xi1>, vector<8x1xf32>
    %c6_i32 = arith.constant 6 : i32
    %34 = vector.broadcast %c6_i32 : i32 to vector<8x1xi32>
    %35 = arith.cmpi sle, %28, %34 : vector<8x1xi32>
    %c7_i32 = arith.constant 7 : i32
    %36 = tpu.dynamic_rotate %27 by %c7_i32 dim 0 : vector<8x1xf32>, i32 -> vector<8x1xf32>
    %cst_11 = arith.constant 0.000000e+00 : f32
    %37 = vector.broadcast %cst_11 : f32 to vector<8x1xf32>
    %38 = arith.select %35, %36, %37 : vector<8x1xi1>, vector<8x1xf32>
    %c0_12 = arith.constant 0 : index
    %39 = memref.load %arg1[%c0_12] : memref<3xf32, #tpu.memory_space<smem>>
    %40 = vector.broadcast %39 : f32 to vector<8x1xf32>
    %41 = arith.mulf %40, %33 : vector<8x1xf32>
    %c1 = arith.constant 1 : index
    %42 = memref.load %arg1[%c1] : memref<3xf32, #tpu.memory_space<smem>>
    %43 = vector.broadcast %42 : f32 to vector<8x1xf32>
    %44 = arith.mulf %43, %27 : vector<8x1xf32>
    %45 = arith.addf %41, %44 : vector<8x1xf32>
    %c2 = arith.constant 2 : index
    %46 = memref.load %arg1[%c2] : memref<3xf32, #tpu.memory_space<smem>>
    %47 = vector.broadcast %46 : f32 to vector<8x1xf32>
    %48 = arith.mulf %47, %38 : vector<8x1xf32>
    %49 = arith.addf %45, %48 : vector<8x1xf32>
    %50 = arith.negf %49 : vector<8x1xf32>
    %51 = math.exp %50 : vector<8x1xf32>
    %cst_13 = arith.constant 1.000000e+00 : f32
    %52 = vector.broadcast %cst_13 : f32 to vector<8x1xf32>
    %53 = arith.addf %52, %51 : vector<8x1xf32>
    %54 = arith.divf %52, %53 : vector<8x1xf32>
    %55 = tpu.concatenate %54, %54, %54, %54, %54, %54, %54, %54 in 0 : vector<8x1xf32>, vector<8x1xf32>, vector<8x1xf32>, vector<8x1xf32>, vector<8x1xf32>, vector<8x1xf32>, vector<8x1xf32>, vector<8x1xf32> -> vector<64x1xf32>
    %56 = vector.broadcast %55 : vector<64x1xf32> to vector<64x128xf32>
    %57 = arith.mulf %8, %56 : vector<64x128xf32>
    %c0_14 = arith.constant 0 : index
    %c0_15 = arith.constant 0 : index
    %58 = vector.load %arg5[%c0_14, %c0_15] : memref<48x64xf32, #tpu.memory_space<vmem>>, vector<48x64xf32>
    %cst_16 = arith.constant dense<0.000000e+00> : vector<48x128xf32>
    %59 = tpu.matmul %58, %57, %cst_16 {dimension_numbers = #tpu.dot_dimension_numbers<[1], [0], [0], [1], [0, 0, 1, 1], [], []>} : vector<48x64xf32>, vector<64x128xf32>, vector<48x128xf32> -> vector<48x128xf32>
    %c0_17 = arith.constant 0 : index
    %c0_18 = arith.constant 0 : index
    %60 = vector.load %arg6[%c0_17, %c0_18] : memref<48x1xf32, #tpu.memory_space<vmem>>, vector<48x1xf32>
    %61 = vector.broadcast %60 : vector<48x1xf32> to vector<48x128xf32>
    %62 = arith.addf %59, %61 : vector<48x128xf32>
    %c0_19 = arith.constant 0 : index
    %c0_20 = arith.constant 0 : index
    %c0_21 = arith.constant 0 : index
    %63 = vector.load %arg7[%c0_19, %c0_20, %c0_21] : memref<1x48x128xf32, #tpu.memory_space<vmem>>, vector<1x48x128xf32>
    %64 = vector.shape_cast %63 : vector<1x48x128xf32> to vector<48x128xf32>
    %65 = vector.shape_cast %62 : vector<48x128xf32> to vector<1x48x128xf32>
    tpu.vector_store %arg7[%c0_19, %c0_20, %c0_21], %65 {strides = array<i32>} : memref<1x48x128xf32, #tpu.memory_space<vmem>>, vector<1x48x128xf32>,
    return
  }
  func.func @transform_0(%arg0: i32, %arg1: memref<3xf32, #tpu.memory_space<smem>>) -> (i32, i32, i32) {
    %c0_i32 = arith.constant 0 : i32
    %c0_i32_0 = arith.constant 0 : i32
    %c0_i32_1 = arith.constant 0 : i32
    return %arg0, %c0_i32, %c0_i32_0 : i32, i32, i32
  }
  func.func @transform_1(%arg0: i32, %arg1: memref<3xf32, #tpu.memory_space<smem>>) -> (i32, i32) {
    %c0_i32 = arith.constant 0 : i32
    %c0_i32_0 = arith.constant 0 : i32
    %c0_i32_1 = arith.constant 0 : i32
    return %c0_i32, %c0_i32_0 : i32, i32
  }
  func.func @transform_2(%arg0: i32, %arg1: memref<3xf32, #tpu.memory_space<smem>>) -> (i32, i32) {
    %c0_i32 = arith.constant 0 : i32
    %c0_i32_0 = arith.constant 0 : i32
    %c0_i32_1 = arith.constant 0 : i32
    return %c0_i32, %c0_i32_0 : i32, i32
  }
  func.func @transform_3(%arg0: i32, %arg1: memref<3xf32, #tpu.memory_space<smem>>) -> (i32, i32) {
    %c0_i32 = arith.constant 0 : i32
    %c0_i32_0 = arith.constant 0 : i32
    %c0_i32_1 = arith.constant 0 : i32
    return %c0_i32, %c0_i32_0 : i32, i32
  }
  func.func @transform_4(%arg0: i32, %arg1: memref<3xf32, #tpu.memory_space<smem>>) -> (i32, i32) {
    %c0_i32 = arith.constant 0 : i32
    %c0_i32_0 = arith.constant 0 : i32
    %c0_i32_1 = arith.constant 0 : i32
    return %c0_i32, %c0_i32_0 : i32, i32
  }
  func.func @transform_5(%arg0: i32, %arg1: memref<3xf32, #tpu.memory_space<smem>>) -> (i32, i32, i32) {
    %c0_i32 = arith.constant 0 : i32
    %c0_i32_0 = arith.constant 0 : i32
    %c0_i32_1 = arith.constant 0 : i32
    return %arg0, %c0_i32, %c0_i32_0 : i32, i32, i32
  }
}

</mosaic_0001>

<llo_original>
// kernel: tpu_custom_call.1
$region0: #{tpu_custom_call.1}
  #allocation0 [shape = 'u32[]', space=smem, size = 0x4, offset = 0x4, fixed_abs, tag = 'smem constant byte address 0x4 - core index']
  #allocation1 [shape = 'u32[72,128]{1,0:T(1,128)}', space=vmem, size = 0x9000, scoped, tag = 'internal scratch']
  #allocation2 [shape = 's32[1]{0}', space=sflag, size = 0x4, scoped, tag = 'scoped memory for tpu_custom_call.1']
  #allocation3 [shape = 'u8[512]{0}', space=smem, size = 0x200, scoped, tag = 'prefetched SMEM operand 0']
  %s0 = inlined_call_operand.vmem [shape: f32[3], index: 0, kind: input, shape index: {}]
  %s1 = inlined_call_operand.vmem [shape: f32[2,48,128], index: 1, kind: input, shape index: {}]
  %s2 = inlined_call_operand.vmem [shape: f32[64,48], index: 2, kind: input, shape index: {}]
  %s3 = inlined_call_operand.vmem [shape: f32[64,1], index: 3, kind: input, shape index: {}]
  %s4 = inlined_call_operand.vmem [shape: f32[48,64], index: 4, kind: input, shape index: {}]
  %s5 = inlined_call_operand.vmem [shape: f32[48,1], index: 5, kind: input, shape index: {}]
  %s6 = inlined_call_operand.hbm [shape: f32[2,48,128], index: 6, kind: output, shape index: {}]
  %s7 = sld [smem:[#allocation0]]
  $region53: #{tpu_custom_call.1} parent=0
    _
  %s9 = ssub.s32 1, %s7
  %s10 = scalar_select 0, %s9, %s7
  %s12 = sshll.u32 %s0, 4
  %s13 = int_to_ptr.vmem [resolvable:$true] %s12
  %15 = dma.vmem_to_smem %s13, 16, [#allocation3], [#allocation2]
  %17 = dma.done [#allocation2], 16
  %18 = sfence
  $region1: #{tpu_custom_call.1} parent=0
    #allocation4 [shape = 'u8[49152]{0}', space=vmem, size = 0xc000, scoped, tag = 'output window, operand 0']
    #allocation5 [shape = 's32[2]{0}', space=sflag, size = 0x8, scoped, tag = 'scoped memory for tpu_custom_call.1']
    %19 = vsyncpa [#allocation5], 0
    %s20 = scalar_lea.sflag [#allocation5], 1
    %21 = vsyncpa %s20, 0
    loop: start=0, step=1, limit=4
    $region2: #{tpu_custom_call.1} parent=1 // loop_pre_header
      _
    $region3: #{tpu_custom_call.1} parent=1 // loop_header
      %s23 = sphi 0, %s27
      %p24 = scmp.ge.s32.totalorder %s23, 4
      %s33 = sphi 0, %s35
      %s36 = sphi 0, %s33
      %s37 = sphi 0, %s36
      %s53 = sphi 0, %s37
      %s57 = sphi 0, %s57
      %s59 = sphi 0, %s57
      %s60 = sphi 0, %s59
      %s74 = sphi 0, %s60
      %s78 = sphi 0, %s78
      %s80 = sphi 0, %s78
      %s81 = sphi 0, %s80
      %s95 = sphi 0, %s81
      %s99 = sphi 0, %s99
      %s101 = sphi 0, %s99
      %s102 = sphi 0, %s101
      %s116 = sphi 0, %s102
      %s120 = sphi 0, %s120
      %s122 = sphi 0, %s120
      %s123 = sphi 0, %s122
      %s137 = sphi 0, %s123
      %s143 = sphi 0, %s145
      %s146 = sphi 0, %s143
      %s147 = sphi 0, %s146
      %s163 = sphi 0, %s147
    $region4: #{tpu_custom_call.1} parent=1 // loop_header_branch
      %26 = sbr.rel (%p24) target = $region8
    $region5: #{tpu_custom_call.1} parent=1 // loop_body
      %s28 = ssub.s32 %s23, 1
      %s29 = ssub.s32 %s23, 2
      %s30 = sadd.s32 %s23, 1
      %s31 = ssub.s32 %s23, %s30
      %p32 = scmp.eq.s32.totalorder %s31, 0
      %s34 = sadd.s32 %s33, 1
      %s35 = scalar_select %p32, %s33, %s34
      %p38 = pneg %p32
      %p39 = scmp.eq.s32.totalorder %s23, 1
      %p40 = por %p38, %p39
      %p41 = scmp.ne.s32.totalorder %s33, %s36
      %p42 = scmp.eq.s32.totalorder %s23, 0
      %p43 = por %p41, %p42
      %p44 = scmp.ne.s32.totalorder %s33, %s36
      %p45 = scmp.eq.s32.totalorder %s28, 1
      %p46 = por %p44, %p45
      %p47 = scmp.ne.s32.totalorder %s36, %s37
      %p48 = scmp.eq.s32.totalorder %s28, 0
      %p49 = por %p47, %p48
      %p50 = scmp.ne.s32.totalorder %s36, %s37
      %p51 = scmp.eq.s32.totalorder %s29, 1
      %p52 = por %p50, %p51
      %p54 = scmp.ne.s32.totalorder %s37, %s53
      %p55 = scmp.eq.s32.totalorder %s29, 0
      %p56 = por %p54, %p55
      %s58 = sadd.s32 %s57, 1
      %p61 = scmp.eq.s32.totalorder %s23, 1
      %p62 = scmp.ne.s32.totalorder %s57, %s59
      %p63 = scmp.eq.s32.totalorder %s23, 0
      %p64 = por %p62, %p63
      %p65 = scmp.ne.s32.totalorder %s57, %s59
      %p66 = scmp.eq.s32.totalorder %s28, 1
      %p67 = por %p65, %p66
      %p68 = scmp.ne.s32.totalorder %s59, %s60
      %p69 = scmp.eq.s32.totalorder %s28, 0
      %p70 = por %p68, %p69
      %p71 = scmp.ne.s32.totalorder %s59, %s60
      %p72 = scmp.eq.s32.totalorder %s29, 1
      %p73 = por %p71, %p72
      %p75 = scmp.ne.s32.totalorder %s60, %s74
      %p76 = scmp.eq.s32.totalorder %s29, 0
      %p77 = por %p75, %p76
      %s79 = sadd.s32 %s78, 1
      %p82 = scmp.eq.s32.totalorder %s23, 1
      %p83 = scmp.ne.s32.totalorder %s78, %s80
      %p84 = scmp.eq.s32.totalorder %s23, 0
      %p85 = por %p83, %p84
      %p86 = scmp.ne.s32.totalorder %s78, %s80
      %p87 = scmp.eq.s32.totalorder %s28, 1
      %p88 = por %p86, %p87
      %p89 = scmp.ne.s32.totalorder %s80, %s81
      %p90 = scmp.eq.s32.totalorder %s28, 0
      %p91 = por %p89, %p90
      %p92 = scmp.ne.s32.totalorder %s80, %s81
      %p93 = scmp.eq.s32.totalorder %s29, 1
      %p94 = por %p92, %p93
      %p96 = scmp.ne.s32.totalorder %s81, %s95
      %p97 = scmp.eq.s32.totalorder %s29, 0
      %p98 = por %p96, %p97
      %s100 = sadd.s32 %s99, 1
      %p103 = scmp.eq.s32.totalorder %s23, 1
      %p104 = scmp.ne.s32.totalorder %s99, %s101
      %p105 = scmp.eq.s32.totalorder %s23, 0
      %p106 = por %p104, %p105
      %p107 = scmp.ne.s32.totalorder %s99, %s101
      %p108 = scmp.eq.s32.totalorder %s28, 1
      %p109 = por %p107, %p108
      %p110 = scmp.ne.s32.totalorder %s101, %s102
      %p111 = scmp.eq.s32.totalorder %s28, 0
      %p112 = por %p110, %p111
      %p113 = scmp.ne.s32.totalorder %s101, %s102
      %p114 = scmp.eq.s32.totalorder %s29, 1
      %p115 = por %p113, %p114
      %p117 = scmp.ne.s32.totalorder %s102, %s116
      %p118 = scmp.eq.s32.totalorder %s29, 0
      %p119 = por %p117, %p118
      %s121 = sadd.s32 %s120, 1
      %p124 = scmp.eq.s32.totalorder %s23, 1
      %p125 = scmp.ne.s32.totalorder %s120, %s122
      %p126 = scmp.eq.s32.totalorder %s23, 0
      %p127 = por %p125, %p126
      %p128 = scmp.ne.s32.totalorder %s120, %s122
      %p129 = scmp.eq.s32.totalorder %s28, 1
      %p130 = por %p128, %p129
      %p131 = scmp.ne.s32.totalorder %s122, %s123
      %p132 = scmp.eq.s32.totalorder %s28, 0
      %p133 = por %p131, %p132
      %p134 = scmp.ne.s32.totalorder %s122, %s123
      %p135 = scmp.eq.s32.totalorder %s29, 1
      %p136 = por %p134, %p135
      %p138 = scmp.ne.s32.totalorder %s123, %s137
      %p139 = scmp.eq.s32.totalorder %s29, 0
      %p140 = por %p138, %p139
      %s141 = ssub.s32 %s23, %s30
      %p142 = scmp.eq.s32.totalorder %s141, 0
      %s144 = sadd.s32 %s143, 1
      %s145 = scalar_select %p142, %s143, %s144
      %p148 = pneg %p142
      %p149 = scmp.eq.s32.totalorder %s23, 1
      %p150 = por %p148, %p149
      %p151 = scmp.ne.s32.totalorder %s143, %s146
      %p152 = scmp.eq.s32.totalorder %s23, 0
      %p153 = por %p151, %p152
      %p154 = scmp.ne.s32.totalorder %s143, %s146
      %p155 = scmp.eq.s32.totalorder %s28, 1
      %p156 = por %p154, %p155
      %p157 = scmp.ne.s32.totalorder %s146, %s147
      %p158 = scmp.eq.s32.totalorder %s28, 0
      %p159 = por %p157, %p158
      %p160 = scmp.ne.s32.totalorder %s146, %s147
      %p161 = scmp.eq.s32.totalorder %s29, 1
      %p162 = por %p160, %p161
      %p164 = scmp.ne.s32.totalorder %s147, %s163
      %p165 = scmp.eq.s32.totalorder %s29, 0
      %p166 = por %p164, %p165
      %p167 = scmp.le.s32.totalorder 1, %s23
      %p168 = scmp.lt.s32.totalorder %s23, 3
      %p169 = pnand %p167, %p168
      %p170 = pneg %p169
      // Predicated region
      $region9: #{tpu_custom_call.1} parent=5 // pred_check
        _
      $region10: #{tpu_custom_call.1} parent=5 // pred_check_branch
        %172 = sbr.rel (%p169) target = $region12
      $region11: #{tpu_custom_call.1} parent=5 // pred_region
        %s173 = ssub.s32 %s23, 1
        // Predicated region
        $region13: #{tpu_custom_call.1} parent=11 // pred_check
          %p174 = pneg %p70
        $region14: #{tpu_custom_call.1} parent=11 // pred_check_branch
          %176 = sbr.rel (%p174) target = $region16
        $region15: #{tpu_custom_call.1} parent=11 // pred_region
          _
        $region16: #{tpu_custom_call.1} parent=11 // pred_fallthru
          _
        // Predicated region
        $region17: #{tpu_custom_call.1} parent=11 // pred_check
          %p177 = pneg %p91
        $region18: #{tpu_custom_call.1} parent=11 // pred_check_branch
          %179 = sbr.rel (%p177) target = $region20
        $region19: #{tpu_custom_call.1} parent=11 // pred_region
          _
        $region20: #{tpu_custom_call.1} parent=11 // pred_fallthru
          _
        // Predicated region
        $region21: #{tpu_custom_call.1} parent=11 // pred_check
          %p180 = pneg %p112
        $region22: #{tpu_custom_call.1} parent=11 // pred_check_branch
          %182 = sbr.rel (%p180) target = $region24
        $region23: #{tpu_custom_call.1} parent=11 // pred_region
          _
        $region24: #{tpu_custom_call.1} parent=11 // pred_fallthru
          _
        // Predicated region
        $region25: #{tpu_custom_call.1} parent=11 // pred_check
          %p183 = pneg %p133
        $region26: #{tpu_custom_call.1} parent=11 // pred_check_branch
          %185 = sbr.rel (%p183) target = $region28
        $region27: #{tpu_custom_call.1} parent=11 // pred_region
          _
        $region28: #{tpu_custom_call.1} parent=11 // pred_fallthru
          _
      $region12: #{tpu_custom_call.1} parent=5 // pred_fallthru
        _
      %p186 = scmp.lt.s32.totalorder %s23, 2
      // Predicated region
      $region29: #{tpu_custom_call.1} parent=5 // pred_check
        %p187 = pneg %p186
      $region30: #{tpu_custom_call.1} parent=5 // pred_check_branch
        %189 = sbr.rel (%p187) target = $region32
      $region31: #{tpu_custom_call.1} parent=5 // pred_region
        // Predicated region
        $region33: #{tpu_custom_call.1} parent=31 // pred_check
          %p190 = pneg %p43
        $region34: #{tpu_custom_call.1} parent=31 // pred_check_branch
          %192 = sbr.rel (%p190) target = $region36
        $region35: #{tpu_custom_call.1} parent=31 // pred_region
          %p193 = scmp.lt.s32.totalorder %s23, 1
          %s194 = scalar_select %p193, %s23, 1
          %s195 = smul.addr %s194, 6
          %s196 = smul.addr %s195, 8
          %s197 = scalar_lea.vmem %s1, %s196
        $region36: #{tpu_custom_call.1} parent=31 // pred_fallthru
          _
      $region32: #{tpu_custom_call.1} parent=5 // pred_fallthru
        _
      %p198 = scmp.le.s32.totalorder 1, %s23
      %p199 = scmp.lt.s32.totalorder %s23, 3
      %p200 = pnand %p198, %p199
      %p201 = pneg %p200
      // Predicated region
      $region37: #{tpu_custom_call.1} parent=5 // pred_check
        _
      $region38: #{tpu_custom_call.1} parent=5 // pred_check_branch
        %203 = sbr.rel (%p200) target = $region40
      $region39: #{tpu_custom_call.1} parent=5 // pred_region
        %s204 = ssub.s32 %s23, 1
        %p205 = scmp.lt.s32.totalorder %s28, 1
        %s206 = scalar_select %p205, %s28, 1
        %s207 = smul.addr %s206, 6
        %s208 = smul.addr %s207, 8
        %s209 = scalar_lea.vmem %s1, %s208
        %p210 = pneg %p49
        %p211 = pneg %p46
        %p212 = pneg %p70
        %p213 = pneg %p67
        %p214 = pneg %p91
        %p215 = pneg %p88
        %p216 = pneg %p112
        %p217 = pneg %p109
        %p218 = pneg %p133
        %p219 = pneg %p130
        %p220 = pneg %p159
        %p221 = pneg %p156
        %s222 = sand.u32 %s146, 1
        %s223 = scalar_lea.sflag [#allocation5], %s222
        %s224 = sand.u32 %s146, 1
        %s225 = smul.addr %s224, 48
        %s226 = scalar_lea.vmem [#allocation4], %s225
        %p227 = scmp.lt.s32.totalorder %s28, 1
        %s228 = scalar_select %p227, %s28, 1
        %s229 = smul.addr %s228, 6
        %s230 = smul.addr %s229, 8
        %s231 = scalar_lea.vmem %s1, %s230
        %v232 = vld [vmem:[%s231] sm:$0xff]
        %v233 = vld [vmem:[%s231 + $0x8] sm:$0xff]
        %v234 = vld [vmem:[%s231 + $0x10] sm:$0xff]
        %v235 = vld [vmem:[%s231 + $0x18] sm:$0xff]
        %v236 = vld [vmem:[%s231 + $0x20] sm:$0xff]
        %v237 = vld [vmem:[%s231 + $0x28] sm:$0xff]
        %v238 = vld [vmem:[%s2] sm:$0xff]
        %v239 = vld [vmem:[%s2 + $0x8] sm:$0xff]
        %v240 = vld [vmem:[%s2 + $0x10] sm:$0xff]
        %v241 = vld [vmem:[%s2 + $0x18] sm:$0xff]
        %v242 = vld [vmem:[%s2 + $0x20] sm:$0xff]
        %v243 = vld [vmem:[%s2 + $0x28] sm:$0xff]
        %v244 = vld [vmem:[%s2 + $0x30] sm:$0xff]
        %v245 = vld [vmem:[%s2 + $0x38] sm:$0xff]
        %v246 = vld [vmem:[%s3] sm:$0xff]
        %v247 = vld [vmem:[%s3 + $0x8] sm:$0xff]
        %v248 = vld [vmem:[%s3 + $0x10] sm:$0xff]
        %v249 = vld [vmem:[%s3 + $0x18] sm:$0xff]
        %v250 = vld [vmem:[%s3 + $0x20] sm:$0xff]
        %v251 = vld [vmem:[%s3 + $0x28] sm:$0xff]
        %v252 = vld [vmem:[%s3 + $0x30] sm:$0xff]
        %v253 = vld [vmem:[%s3 + $0x38] sm:$0xff]
        %255 = vset.pattern.permute.xlu0 0
        %256 = vperm.xlu0 %255, %v246
        %v257 = vpop.permute.xlu0 %256
        %260 = vset.pattern.permute.xlu0 0
        %261 = vperm.xlu0 %260, %v247
        %v262 = vpop.permute.xlu0 %261
        %265 = vset.pattern.permute.xlu0 0
        %266 = vperm.xlu0 %265, %v248
        %v267 = vpop.permute.xlu0 %266
        %270 = vset.pattern.permute.xlu0 0
        %271 = vperm.xlu0 %270, %v249
        %v272 = vpop.permute.xlu0 %271
        %275 = vset.pattern.permute.xlu0 0
        %276 = vperm.xlu0 %275, %v250
        %v277 = vpop.permute.xlu0 %276
        %280 = vset.pattern.permute.xlu0 0
        %281 = vperm.xlu0 %280, %v251
        %v282 = vpop.permute.xlu0 %281
        %285 = vset.pattern.permute.xlu0 0
        %286 = vperm.xlu0 %285, %v252
        %v287 = vpop.permute.xlu0 %286
        %290 = vset.pattern.permute.xlu0 0
        %291 = vperm.xlu0 %290, %v253
        %v292 = vpop.permute.xlu0 %291
        %vm294 = vcmask 392192
        %v296 = vsel %vm294, %v238, 0
        %v299 = vsel %vm294, %v239, 0
        %v302 = vsel %vm294, %v240, 0
        %v305 = vsel %vm294, %v241, 0
        %v308 = vsel %vm294, %v242, 0
        %v311 = vsel %vm294, %v243, 0
        %v314 = vsel %vm294, %v244, 0
        %v317 = vsel %vm294, %v245, 0
        %319 = vmatpush.msra.mxu0 0.0
        %320 = vmatpush.msra.mxu0 0.0
        %321 = vmatpush.msra.mxu0 0.0
        %322 = vmatpush.msra.mxu0 0.0
        %323 = vmatpush.msra.mxu0 0.0
        %324 = vmatpush.msra.mxu0 0.0
        %325 = vmatpush.msra.mxu0 0.0
        %326 = vmatpush.msra.mxu0 0.0
        %327 = vmatpush.msra.mxu0 0.0
        %328 = vmatpush.msra.mxu0 0.0
        %329 = vmatpush.msra.mxu0 %v237
        %330 = vmatpush.msra.mxu0 %v236
        %331 = vmatpush.msra.mxu0 %v235
        %332 = vmatpush.msra.mxu0 %v234
        %333 = vmatpush.msra.mxu0 %v233
        %334 = vmatpush.msra.mxu0 %v232
        %335 = vmatmul.f32.gmra.mxu0 %v296
        %v336 = vpop.f32.mrf.mxu0
        %v337 = vadd.f32 %v257, %v336
        %338 = vmatmul.f32.gmra.mxu0 %v299
        %v339 = vpop.f32.mrf.mxu0
        %v340 = vadd.f32 %v262, %v339
        %341 = vmatmul.f32.gmra.mxu0 %v302
        %v342 = vpop.f32.mrf.mxu0
        %v343 = vadd.f32 %v267, %v342
        %344 = vmatmul.f32.gmra.mxu0 %v305
        %v345 = vpop.f32.mrf.mxu0
        %v346 = vadd.f32 %v272, %v345
        %347 = vmatmul.f32.gmra.mxu0 %v308
        %v348 = vpop.f32.mrf.mxu0
        %v349 = vadd.f32 %v277, %v348
        %350 = vmatmul.f32.gmra.mxu0 %v311
        %v351 = vpop.f32.mrf.mxu0
        %v352 = vadd.f32 %v282, %v351
        %353 = vmatmul.f32.gmra.mxu0 %v314
        %v354 = vpop.f32.mrf.mxu0
        %v355 = vadd.f32 %v287, %v354
        %356 = vmatmul.f32.gmra.mxu0 %v317
        %v357 = vpop.f32.mrf.mxu0
        %v358 = vadd.f32 %v292, %v357
        %359 = vdwg.mxu0
        %v360 = vmax.f32 %v337, 0.0
        %v361 = vmax.f32 %v340, 0.0
        %v362 = vmax.f32 %v343, 0.0
        %v363 = vmax.f32 %v346, 0.0
        %v364 = vmax.f32 %v349, 0.0
        %v365 = vmax.f32 %v352, 0.0
        %v366 = vmax.f32 %v355, 0.0
        %v367 = vmax.f32 %v358, 0.0
        %368 = vadd.xlane.f32.xlu0 %v360
        %v369 = vpop.xlane.xlu0 %368
        %370 = vadd.xlane.f32.xlu0 %v361
        %v371 = vpop.xlane.xlu0 %370
        %372 = vadd.xlane.f32.xlu0 %v362
        %v373 = vpop.xlane.xlu0 %372
        %374 = vadd.xlane.f32.xlu0 %v363
        %v375 = vpop.xlane.xlu0 %374
        %376 = vadd.xlane.f32.xlu0 %v364
        %v377 = vpop.xlane.xlu0 %376
        %378 = vadd.xlane.f32.xlu0 %v365
        %v379 = vpop.xlane.xlu0 %378
        %380 = vadd.xlane.f32.xlu0 %v366
        %v381 = vpop.xlane.xlu0 %380
        %382 = vadd.xlane.f32.xlu0 %v367
        %v383 = vpop.xlane.xlu0 %382
        %v384 = vadd.f32 %v369, %v371
        %v385 = vadd.f32 %v384, %v373
        %v386 = vadd.f32 %v385, %v375
        %v387 = vadd.f32 %v386, %v377
        %v388 = vadd.f32 %v387, %v379
        %v389 = vadd.f32 %v388, %v381
        %v390 = vadd.f32 %v389, %v383
        %v391 = vmul.f32 %v390, 0.0009765625
        %v392 = vlaneseq
        %v393 = vshrl.u32 %v392, 7
        %vm394 = vcmp.ge.s32.totalorder %v393, 1
        %v395 = vrot.slane %v391, 7
        %v396 = vsel %vm394, %v395, 0.0
        %vm397 = vcmp.le.s32.totalorder %v393, 6
        %v398 = vrot.slane %v391, 1
        %v399 = vsel %vm397, %v398, 0.0
        %s400 = sld [smem:[#allocation3]]
        %v401 = vstv %s400
        %v402 = vmul.f32 %v401, %v396
        %s403 = sld [smem:[#allocation3 + $0x1]]
        %v404 = vstv %s403
        %v405 = vmul.f32 %v404, %v391
        %v406 = vadd.f32 %v402, %v405
        %s407 = sld [smem:[#allocation3 + $0x2]]
        %v408 = vstv %s407
        %v409 = vmul.f32 %v408, %v399
        %v410 = vadd.f32 %v406, %v409
        %v411 = vxor.u32 %v410, 2147483648
        %v412 = vmul.f32 %v411, 1.442695
        %v413 = vpow.pop %v412
        %v414 = vadd.f32 %v413, 1.0
        %v415 = vrcp.pop %v414
        %v416 = vmul.f32 %v414, %v415
        %v417 = vsub.f32 1.0, %v416
        %v418 = vmul.f32 %v415, %v417
        %v419 = vadd.f32 %v415, %v418
        %vm420 = vweird.f32 %v414
        %vm421 = vweird.f32 %v415
        %vm422 = vmor %vm420, %vm421
        %v423 = vsel %vm422, %v415, %v419
        %v424 = vand.u32 2147483647, %v414
        %vm425 = vcmp.eq.f32.partialorder %v424, 8.507059e+37
        %v426 = vand.u32 %v414, 2147483648
        %v427 = vor.u32 1.1754944e-38, %v426
        %v428 = vsel %vm425, %v427, %v423
        %v429 = vmul.f32 1.0, %v428
        %431 = vset.pattern.permute.xlu0 0
        %432 = vperm.xlu0 %431, %v429
        %v433 = vpop.permute.xlu0 %432
        %v435 = vmul.f32 %v360, %v433
        %v436 = vmul.f32 %v361, %v433
        %v437 = vmul.f32 %v362, %v433
        %v438 = vmul.f32 %v363, %v433
        %v439 = vmul.f32 %v364, %v433
        %v440 = vmul.f32 %v365, %v433
        %v441 = vmul.f32 %v366, %v433
        %v442 = vmul.f32 %v367, %v433
        %v443 = vld [vmem:[%s4] sm:$0xff]
        %v444 = vld [vmem:[%s4 + $0x8] sm:$0xff]
        %v445 = vld [vmem:[%s4 + $0x10] sm:$0xff]
        %v446 = vld [vmem:[%s4 + $0x18] sm:$0xff]
        %v447 = vld [vmem:[%s4 + $0x20] sm:$0xff]
        %v448 = vld [vmem:[%s4 + $0x28] sm:$0xff]
        %v449 = vld [vmem:[%s5] sm:$0xff]
        %v450 = vld [vmem:[%s5 + $0x8] sm:$0xff]
        %v451 = vld [vmem:[%s5 + $0x10] sm:$0xff]
        %v452 = vld [vmem:[%s5 + $0x18] sm:$0xff]
        %v453 = vld [vmem:[%s5 + $0x20] sm:$0xff]
        %v454 = vld [vmem:[%s5 + $0x28] sm:$0xff]
        %456 = vset.pattern.permute.xlu0 0
        %457 = vperm.xlu0 %456, %v449
        %v458 = vpop.permute.xlu0 %457
        %461 = vset.pattern.permute.xlu0 0
        %462 = vperm.xlu0 %461, %v450
        %v463 = vpop.permute.xlu0 %462
        %466 = vset.pattern.permute.xlu0 0
        %467 = vperm.xlu0 %466, %v451
        %v468 = vpop.permute.xlu0 %467
        %471 = vset.pattern.permute.xlu0 0
        %472 = vperm.xlu0 %471, %v452
        %v473 = vpop.permute.xlu0 %472
        %476 = vset.pattern.permute.xlu0 0
        %477 = vperm.xlu0 %476, %v453
        %v478 = vpop.permute.xlu0 %477
        %481 = vset.pattern.permute.xlu0 0
        %482 = vperm.xlu0 %481, %v454
        %v483 = vpop.permute.xlu0 %482
        %vm485 = vcmask 523264
        %v487 = vsel %vm485, %v443, 0
        %v490 = vsel %vm485, %v444, 0
        %v493 = vsel %vm485, %v445, 0
        %v496 = vsel %vm485, %v446, 0
        %v499 = vsel %vm485, %v447, 0
        %v502 = vsel %vm485, %v448, 0
        %504 = vmatpush.msra.mxu0 0.0
        %505 = vmatpush.msra.mxu0 0.0
        %506 = vmatpush.msra.mxu0 0.0
        %507 = vmatpush.msra.mxu0 0.0
        %508 = vmatpush.msra.mxu0 0.0
        %509 = vmatpush.msra.mxu0 0.0
        %510 = vmatpush.msra.mxu0 0.0
        %511 = vmatpush.msra.mxu0 0.0
        %512 = vmatpush.msra.mxu0 %v442
        %513 = vmatpush.msra.mxu0 %v441
        %514 = vmatpush.msra.mxu0 %v440
        %515 = vmatpush.msra.mxu0 %v439
        %516 = vmatpush.msra.mxu0 %v438
        %517 = vmatpush.msra.mxu0 %v437
        %518 = vmatpush.msra.mxu0 %v436
        %519 = vmatpush.msra.mxu0 %v435
        %520 = vmatmul.f32.gmra.mxu0 %v487
        %v521 = vpop.f32.mrf.mxu0
        %v522 = vadd.f32 %v458, %v521
        %523 = vmatmul.f32.gmra.mxu0 %v490
        %v524 = vpop.f32.mrf.mxu0
        %v525 = vadd.f32 %v463, %v524
        %526 = vmatmul.f32.gmra.mxu0 %v493
        %v527 = vpop.f32.mrf.mxu0
        %v528 = vadd.f32 %v468, %v527
        %529 = vmatmul.f32.gmra.mxu0 %v496
        %v530 = vpop.f32.mrf.mxu0
        %v531 = vadd.f32 %v473, %v530
        %532 = vmatmul.f32.gmra.mxu0 %v499
        %v533 = vpop.f32.mrf.mxu0
        %v534 = vadd.f32 %v478, %v533
        %535 = vmatmul.f32.gmra.mxu0 %v502
        %v536 = vpop.f32.mrf.mxu0
        %v537 = vadd.f32 %v483, %v536
        %538 = vdwg.mxu0
        %539 = vst [vmem:[%s226] sm:$0xff] %v522
        %540 = vst [vmem:[%s226 + $0x8] sm:$0xff] %v525
        %541 = vst [vmem:[%s226 + $0x10] sm:$0xff] %v528
        %542 = vst [vmem:[%s226 + $0x18] sm:$0xff] %v531
        %543 = vst [vmem:[%s226 + $0x20] sm:$0xff] %v534
        %544 = vst [vmem:[%s226 + $0x28] sm:$0xff] %v537
        %s545 = sand.u32 %s146, 1
        %s546 = scalar_lea.sflag [#allocation5], %s545
        %s547 = sand.u32 %s146, 1
        %s548 = smul.addr %s547, 48
        %s549 = scalar_lea.vmem [#allocation4], %s548
        // Predicated region
        $region41: #{tpu_custom_call.1} parent=39 // pred_check
          %p550 = pneg %p156
        $region42: #{tpu_custom_call.1} parent=39 // pred_check_branch
          %552 = sbr.rel (%p550) target = $region44
        $region43: #{tpu_custom_call.1} parent=39 // pred_region
          %554 = vsyncadd %s546, 0
          %s555 = smul.addr %s28, 6
          %s556 = smul.addr %s555, 8
          %s557 = scalar_lea.hbm %s6, %s556
          %s558 = sshll.u32 %s549, 4
          %s559 = int_to_ptr.vmem [resolvable:$true] %s558
          %s560 = sshll.u32 %s557, 4
          %s561 = int_to_ptr.hbm [resolvable:$true] %s560
          %566 = dma.vmem_to_hbm [thread:$0]  %s559, 768, %s561, %s546, 128, 128, 8
        $region44: #{tpu_custom_call.1} parent=39 // pred_fallthru
          _
      $region40: #{tpu_custom_call.1} parent=5 // pred_fallthru
        _
      %p567 = scmp.le.s32.totalorder 2, %s23
      // Predicated region
      $region45: #{tpu_custom_call.1} parent=5 // pred_check
        %p568 = pneg %p567
      $region46: #{tpu_custom_call.1} parent=5 // pred_check_branch
        %570 = sbr.rel (%p568) target = $region48
      $region47: #{tpu_custom_call.1} parent=5 // pred_region
        %s571 = ssub.s32 %s23, 2
        // Predicated region
        $region49: #{tpu_custom_call.1} parent=47 // pred_check
          %p572 = pneg %p162
        $region50: #{tpu_custom_call.1} parent=47 // pred_check_branch
          %574 = sbr.rel (%p572) target = $region52
        $region51: #{tpu_custom_call.1} parent=47 // pred_region
          %s575 = sand.u32 %s147, 1
          %s576 = scalar_lea.sflag [#allocation5], %s575
          %s577 = sand.u32 %s147, 1
          %s578 = smul.addr %s577, 48
          %s579 = scalar_lea.vmem [#allocation4], %s578
          %581 = dma.done %s576, 768
        $region52: #{tpu_custom_call.1} parent=47 // pred_fallthru
          _
      $region48: #{tpu_custom_call.1} parent=5 // pred_fallthru
        _
    $region6: #{tpu_custom_call.1} parent=1 // loop_footer
      %s27 = sadd.s32 1, %s23
    $region7: #{tpu_custom_call.1} parent=1 // loop_footer_branch
      %22 = sbr.rel target = $region3
    $region8: #{tpu_custom_call.1} parent=1 // loop_exit
      _
    %582 = vsyncpa [#allocation5], 1
    %s583 = scalar_lea.sflag [#allocation5], 1
    %584 = vsyncpa %s583, 1

</llo_original>
